<compile_context>
chip_gen: v6e
topology: v6e:2x2x1
jax: 0.10.0
libtpu: 0.0.40
codegen_flags: <defaults>
</compile_context>

<pallas_src>
import math
from functools import lru_cache

import numpy as np
import jax
import jax.numpy as jnp
from jax.experimental import pallas as pl
from jax.experimental.pallas import tpu as pltpu


# ---------------------------------------------------------------------------
# Clenshaw-Curtis quadrature weights / nodes (exact port of compute_cc_weights)
# ---------------------------------------------------------------------------
def _cc_quadrature(nb_steps):
    lam = np.arange(0, nb_steps + 1, 1).reshape(-1, 1)
    lam = np.cos((lam @ lam.T) * math.pi / nb_steps)
    lam[:, 0] = 0.5
    lam[:, -1] = 0.5 * lam[:, -1]
    lam = lam * 2 / nb_steps
    W = np.arange(0, nb_steps + 1, 1).reshape(-1, 1)
    W[np.arange(1, nb_steps + 1, 2)] = 0
    W = 2 / (1 - W ** 2)
    W[0] = 1
    W[np.arange(1, nb_steps + 1, 2)] = 0
    cc_weights = (lam.T @ W).astype(np.float32)                      # (S, 1)
    steps = np.cos(np.arange(0, nb_steps + 1, 1).reshape(-1, 1)
                   * math.pi / nb_steps).astype(np.float32)          # (S, 1)
    return cc_weights, steps


@lru_cache(maxsize=None)
def _cc_quadrature_folded(nb_steps):
    """(S,) abscissa scales t_s = (steps_s+1)/2 and (S,) weights cc_w_s * 0.5.

    The 0.5 is the (xT - x0)/2 trapezoid factor (x0 = 0), folded host-side so
    the kernel's reduce needs no extra per-element multiply.
    """
    cc_w, steps = _cc_quadrature(nb_steps)
    t = ((steps[:, 0] + 1.0) * 0.5).astype(np.float32)
    w = (cc_w[:, 0] * 0.5).astype(np.float32)
    return t, w


def _round_up(v, m):
    return (v + m - 1) // m * m


# ---------------------------------------------------------------------------
# Pallas kernel: per-batch-tile integrand MLP, looped over quadrature points.
# Everything is (feature, batch)-shaped so batch stays on the 128-lane axis.
# ---------------------------------------------------------------------------
def _monotonic_kernel(t_ref, ccw_ref, x_ref, h_ref,
                      w1x_ref, w1h_ref, b1_ref, w2_ref, b2_ref, w3_ref, b3_ref,
                      out_ref):
    S = t_ref.shape[0]
    H1 = w1h_ref.shape[0]
    Do = w3_ref.shape[0]
    TB = x_ref.shape[1]

    x_row = x_ref[...]                                   # (1,  TB) f32
    h_t = h_ref[...]                                     # (Dh, TB) f32
    mm_dtype = w2_ref.dtype                              # bf16 or f32 (matmul operands)

    # Hoisted layer-1 h-contribution (+ b1): identical for all quadrature points.
    hpart = jnp.dot(w1h_ref[...], h_t,
                    preferred_element_type=jnp.float32) + b1_ref[...]   # (H1, TB)
    # Hoisted layer-1 x-contribution before the per-point abscissa scale.
    xw1 = jnp.broadcast_to(w1x_ref[...], (H1, TB)) * x_row              # (H1, TB)

    w2 = w2_ref[...]                                     # (H2, H1)
    b2 = b2_ref[...]                                     # (H2, 1)
    w3 = w3_ref[...]                                     # (Do, H2)
    b3 = b3_ref[...]                                     # (Do, 1)

    def body(s, acc):
        t_s = t_ref[s]                                   # scalar abscissa scale (SMEM)
        w_s = ccw_ref[s]                                 # scalar CC weight * 0.5 (SMEM)
        a1 = jnp.maximum(xw1 * t_s + hpart, 0.0)                         # (H1, TB)
        a2 = jnp.maximum(
            jnp.dot(w2, a1.astype(mm_dtype),
                    preferred_element_type=jnp.float32) + b2, 0.0)       # (H2, TB)
        z = jnp.dot(w3, a2.astype(mm_dtype),
                    preferred_element_type=jnp.float32) + b3             # (Do, TB)
        # ELU(z) + 1 == z + 1 (z > 0) | exp(z) (z <= 0); the inf of the
        # unselected exp branch for large positive z is discarded by the where.
        f = jnp.where(z > 0.0, z + 1.0, jnp.exp(z))
        return acc + w_s * f

    z_est = jax.lax.fori_loop(0, S, body, jnp.zeros((Do, TB), jnp.float32))

    # (xT - x0)/2 factor is folded into ccw; MonotonicNN adds h0 at the end.
    out_ref[...] = z_est * x_row + h_t


# ---------------------------------------------------------------------------
# Wrapper
# ---------------------------------------------------------------------------
def monotonic_nn_forward(x, h, params, nb_steps=50, use_bf16=True):
    """x: (B, 1), h: (B, Dh).  Returns integral_0^x IntegrandNN([t, h]) dt + h."""
    B = x.shape[0]
    Dh = h.shape[1]
    H1 = params["w1"].shape[1]
    H2 = params["w2"].shape[1]
    out_d = params["w3"].shape[1]
    assert params["w1"].shape[0] == 1 + Dh, "w1 must take the [x, h] concat"
    assert out_d == Dh, "out_d must equal h-dim for the elementwise `integral + h0`"

    t_np, ccw_np = _cc_quadrature_folded(nb_steps)
    S = t_np.shape[0]
    t = jnp.asarray(t_np)                          # (S,)  -> SMEM
    ccw = jnp.asarray(ccw_np)                      # (S,)  -> SMEM

    mm_dtype = jnp.bfloat16 if use_bf16 else jnp.float32

    # Transposed weights so every matmul result keeps batch on the lane axis.
    # Only the in-loop layer-2/3 matmul operands are cast to bf16; the tiny
    # once-per-tile layer-1 h matmul and all elementwise math stay f32.
    w1 = params["w1"]
    w1x = jnp.asarray(w1[0:1, :].T, jnp.float32)    # (H1, 1)   VPU path
    w1h = jnp.asarray(w1[1:, :].T, jnp.float32)     # (H1, Dh)
    b1 = jnp.asarray(params["b1"].T, jnp.float32)   # (H1, 1)
    w2 = jnp.asarray(params["w2"].T, mm_dtype)      # (H2, H1)
    b2 = jnp.asarray(params["b2"].T, jnp.float32)   # (H2, 1)
    w3 = jnp.asarray(params["w3"].T, mm_dtype)      # (Do, H2)
    b3 = jnp.asarray(params["b3"].T, jnp.float32)   # (Do, 1)

    # Batch tile: lane-aligned (multiple of 128), capped at 2048 columns.
    # Per-column VMEM (double-buffered x/h/out + loop temporaries) is < ~1 KiB,
    # so a 2048-column tile is ~2 MiB: safe on v5e's 16 MiB scoped default and
    # well inside v7x's 64 MiB physical VMEM.  Choosing ~ceil(B/2) gives >= 2
    # grid steps for B >= 256 so the "parallel" axis feeds both v7x TensorCores.
    TB = min(2048, _round_up(max(1, pl.cdiv(B, 2)), 128))
    B_pad = _round_up(B, TB)
    grid = (B_pad // TB,)

    # Lane-major (feature-on-sublane, batch-on-lane) inputs, zero-padded to a
    # whole number of tiles (padded columns compute finite garbage, sliced off).
    xT = jnp.zeros((1, B_pad), jnp.float32).at[:, :B].set(x.astype(jnp.float32).T)
    hT = jnp.zeros((Dh, B_pad), jnp.float32).at[:, :B].set(h.astype(jnp.float32).T)

    def tiled(rows):
        return pl.BlockSpec((rows, TB), lambda i: (0, i))

    def resident(shape):
        return pl.BlockSpec(shape, lambda i: (0, 0))

    smem_spec = pl.BlockSpec(memory_space=pltpu.MemorySpace.SMEM)

    flops = 2 * B_pad * Dh * H1 + 2 * B_pad * S * (H1 + H1 * H2 + H2 * out_d)
    cost = pl.CostEstimate(
        flops=int(flops),
        transcendentals=int(B_pad * S * out_d),
        bytes_accessed=int(4 * (B_pad * (1 + Dh + out_d) + 2 * S
                                + H1 * (2 + Dh) + H2 * (H1 + 1) + out_d * (H2 + 1))),
    )

    outT = pl.pallas_call(
        _monotonic_kernel,
        out_shape=jax.ShapeDtypeStruct((out_d, B_pad), jnp.float32),
        grid=grid,
        in_specs=[
            smem_spec, smem_spec,                         # t, ccw (SMEM scalars)
            tiled(1), tiled(Dh),                          # x^T, h^T (batch-tiled)
            resident((H1, 1)), resident((H1, Dh)), resident((H1, 1)),
            resident((H2, H1)), resident((H2, 1)),
            resident((out_d, H2)), resident((out_d, 1)),
        ],
        out_specs=tiled(out_d),
        compiler_params=pltpu.CompilerParams(
            dimension_semantics=("parallel",),
            vmem_limit_bytes=32 * 1024 * 1024),
        cost_estimate=cost,
    )(t, ccw, xT, hT, w1x, w1h, b1, w2, b2, w3, b3)

    return outT[:, :B].T                                 # (B, out_d)


# ---------------------------------------------------------------------------
# Pure-JAX reference (same math, no Pallas) for a sanity check
# ---------------------------------------------------------------------------
def monotonic_nn_reference(x, h, params, nb_steps=50):
    cc_w, steps = _cc_quadrature(nb_steps)
    S = nb_steps + 1
    B, Dh = h.shape
    t = jnp.asarray((steps + 1.0) * 0.5)                       # (S, 1)
    xs = x[:, None, :] * t[None, :, :]                         # (B, S, 1)
    hs = jnp.broadcast_to(h[:, None, :], (B, S, Dh))
    inp = jnp.concatenate([xs, hs], axis=-1)                   # (B, S, 1+Dh)
    a1 = jnp.maximum(inp @ params["w1"] + params["b1"], 0.0)
    a2 = jnp.maximum(a1 @ params["w2"] + params["b2"], 0.0)
    z = a2 @ params["w3"] + params["b3"]
    f = jax.nn.elu(z) + 1.0
    integral = jnp.sum(f * jnp.asarray(cc_w)[None, :, :], axis=1) * (x * 0.5)
    return integral + h


# ---------------------------------------------------------------------------
# Deterministic parameter init (mimics nn.Linear default: U(-1/sqrt(fan_in), .))
# Weights are stored (in, out); the wrapper transposes them for the kernel.
# ---------------------------------------------------------------------------
def init_integrand_params(key, in_d, hidden_layers, out_d):
    assert len(hidden_layers) == 2, "kernel hardcodes a 3-linear-layer integrand"
    dims = [in_d] + list(hidden_layers) + [out_d]
    params = {}
    keys = jax.random.split(key, 2 * (len(dims) - 1))
    for li, (d_in, d_out) in enumerate(zip(dims, dims[1:])):
        k = 1.0 / math.sqrt(d_in)
        params[f"w{li + 1}"] = jax.random.uniform(
            keys[2 * li], (d_in, d_out), jnp.float32, minval=-k, maxval=k)
        params[f"b{li + 1}"] = jax.random.uniform(
            keys[2 * li + 1], (1, d_out), jnp.float32, minval=-k, maxval=k)
    return params


if __name__ == "__main__":
    # TODO(synk): only the forward pass of ParallelNeuralIntegral is implemented
    # (no custom autograd backward).
    key = jax.random.PRNGKey(0)
    B, Dh = 200, 4                     # exercises padding (B_pad=256) + 2 grid steps
    in_d, out_d = 1 + Dh, Dh
    hidden_layers = [32, 32]
    nb_steps = 50

    k_x, k_h, k_p = jax.random.split(key, 3)
    x = jax.random.normal(k_x, (B, 1), dtype=jnp.float32)
    h = jax.random.normal(k_h, (B, Dh), dtype=jnp.float32)
    params = init_integrand_params(k_p, in_d, hidden_layers, out_d)

    y_ref = monotonic_nn_reference(x, h, params, nb_steps=nb_steps)

    # f32 matmul-operand path: tight agreement with the reference.
    y_f32 = monotonic_nn_forward(x, h, params, nb_steps=nb_steps, use_bf16=False)
    jax.block_until_ready(y_f32)
    assert y_f32.shape == (B, out_d)
    np.testing.assert_allclose(np.asarray(y_f32), np.asarray(y_ref),
                               rtol=1e-4, atol=1e-4)

    # bf16 MXU-operand path (f32 accumulation): bf16-level agreement.
    y_bf16 = monotonic_nn_forward(x, h, params, nb_steps=nb_steps, use_bf16=True)
    jax.block_until_ready(y_bf16)
    assert y_bf16.shape == (B, out_d)
    np.testing.assert_allclose(np.asarray(y_bf16), np.asarray(y_ref),
                               rtol=5e-2, atol=5e-2)

    print("KERNEL_OK")
</pallas_src>

<mosaic_0001>
module attributes {stable_mosaic.version = 11 : i64} {
  func.func @_monotonic_kernel(%arg0: i32, %arg1: memref<51xf32, #tpu.memory_space<smem>>, %arg2: memref<51xf32, #tpu.memory_space<smem>>, %arg3: memref<1x128xf32, #tpu.memory_space<vmem>>, %arg4: memref<4x128xf32, #tpu.memory_space<vmem>>, %arg5: memref<32x1xf32, #tpu.memory_space<vmem>>, %arg6: memref<32x4xf32, #tpu.memory_space<vmem>>, %arg7: memref<32x1xf32, #tpu.memory_space<vmem>>, %arg8: memref<32x32xf32, #tpu.memory_space<vmem>>, %arg9: memref<32x1xf32, #tpu.memory_space<vmem>>, %arg10: memref<4x32xf32, #tpu.memory_space<vmem>>, %arg11: memref<4x1xf32, #tpu.memory_space<vmem>>, %arg12: memref<4x128xf32, #tpu.memory_space<vmem>>) attributes {dimension_semantics = [#tpu.dimension_semantics<parallel>], iteration_bounds = array<i64: 2>, scalar_prefetch = 0 : i64, scratch_operands = 0 : i64, tpu.core_type = #tpu.core_type<tc>, window_params = [{transform_indices = @transform_0, window_bounds = array<i64: 51>}, {transform_indices = @transform_1, window_bounds = array<i64: 51>}, {transform_indices = @transform_2, window_bounds = array<i64: 1, 128>}, {transform_indices = @transform_3, window_bounds = array<i64: 4, 128>}, {pipeline_mode = #tpu.pipeline_mode<synchronous>, transform_indices = @transform_4, window_bounds = array<i64: 32, 1>}, {pipeline_mode = #tpu.pipeline_mode<synchronous>, transform_indices = @transform_5, window_bounds = array<i64: 32, 4>}, {pipeline_mode = #tpu.pipeline_mode<synchronous>, transform_indices = @transform_6, window_bounds = array<i64: 32, 1>}, {pipeline_mode = #tpu.pipeline_mode<synchronous>, transform_indices = @transform_7, window_bounds = array<i64: 32, 32>}, {pipeline_mode = #tpu.pipeline_mode<synchronous>, transform_indices = @transform_8, window_bounds = array<i64: 32, 1>}, {pipeline_mode = #tpu.pipeline_mode<synchronous>, transform_indices = @transform_9, window_bounds = array<i64: 4, 32>}, {pipeline_mode = #tpu.pipeline_mode<synchronous>, transform_indices = @transform_10, window_bounds = array<i64: 4, 1>}, {transform_indices = @transform_11, window_bounds = array<i64: 4, 128>}]} {
    %c0 = arith.constant 0 : index
    %c0_0 = arith.constant 0 : index
    %0 = vector.load %arg3[%c0, %c0_0] : memref<1x128xf32, #tpu.memory_space<vmem>>, vector<1x128xf32>
    %c0_1 = arith.constant 0 : index
    %c0_2 = arith.constant 0 : index
    %1 = vector.load %arg4[%c0_1, %c0_2] : memref<4x128xf32, #tpu.memory_space<vmem>>, vector<4x128xf32>
    %c0_3 = arith.constant 0 : index
    %c0_4 = arith.constant 0 : index
    %2 = vector.load %arg6[%c0_3, %c0_4] : memref<32x4xf32, #tpu.memory_space<vmem>>, vector<32x4xf32>
    %cst = arith.constant dense<0.000000e+00> : vector<32x128xf32>
    %3 = tpu.matmul %2, %1, %cst {dimension_numbers = #tpu.dot_dimension_numbers<[1], [0], [0], [1], [0, 0, 1, 1], [], []>} : vector<32x4xf32>, vector<4x128xf32>, vector<32x128xf32> -> vector<32x128xf32>
    %c0_5 = arith.constant 0 : index
    %c0_6 = arith.constant 0 : index
    %4 = vector.load %arg7[%c0_5, %c0_6] : memref<32x1xf32, #tpu.memory_space<vmem>>, vector<32x1xf32>
    %5 = vector.broadcast %4 : vector<32x1xf32> to vector<32x128xf32>
    %6 = arith.addf %3, %5 : vector<32x128xf32>
    %c0_7 = arith.constant 0 : index
    %c0_8 = arith.constant 0 : index
    %7 = vector.load %arg5[%c0_7, %c0_8] : memref<32x1xf32, #tpu.memory_space<vmem>>, vector<32x1xf32>
    %8 = vector.shape_cast %7 : vector<32x1xf32> to vector<32x1xf32>
    %9 = vector.broadcast %8 : vector<32x1xf32> to vector<32x128xf32>
    %10 = vector.broadcast %0 : vector<1x128xf32> to vector<32x128xf32>
    %11 = arith.mulf %9, %10 : vector<32x128xf32>
    %c0_9 = arith.constant 0 : index
    %c0_10 = arith.constant 0 : index
    %12 = vector.load %arg8[%c0_9, %c0_10] : memref<32x32xf32, #tpu.memory_space<vmem>>, vector<32x32xf32>
    %c0_11 = arith.constant 0 : index
    %c0_12 = arith.constant 0 : index
    %13 = vector.load %arg9[%c0_11, %c0_12] : memref<32x1xf32, #tpu.memory_space<vmem>>, vector<32x1xf32>
    %c0_13 = arith.constant 0 : index
    %c0_14 = arith.constant 0 : index
    %14 = vector.load %arg10[%c0_13, %c0_14] : memref<4x32xf32, #tpu.memory_space<vmem>>, vector<4x32xf32>
    %c0_15 = arith.constant 0 : index
    %c0_16 = arith.constant 0 : index
    %15 = vector.load %arg11[%c0_15, %c0_16] : memref<4x1xf32, #tpu.memory_space<vmem>>, vector<4x1xf32>
    %cst_17 = arith.constant 0.000000e+00 : f32
    %16 = vector.broadcast %cst_17 : f32 to vector<4x128xf32>
    %c0_i32 = arith.constant 0 : i32
    %c51_i32 = arith.constant 51 : i32
    %17 = arith.addi %c0_i32, %c51_i32 : i32
    %c1_i32 = arith.constant 1 : i32
    %18 = scf.for %arg13 = %c0_i32 to %17 step %c1_i32 iter_args(%arg14 = %16) -> (vector<4x128xf32>)  : i32 {
      %23 = arith.index_cast %arg13 : i32 to index
      %24 = memref.load %arg1[%23] : memref<51xf32, #tpu.memory_space<smem>>
      %25 = arith.index_cast %arg13 : i32 to index
      %26 = memref.load %arg2[%25] : memref<51xf32, #tpu.memory_space<smem>>
      %27 = vector.broadcast %24 : f32 to vector<32x128xf32>
      %28 = arith.mulf %11, %27 : vector<32x128xf32>
      %29 = arith.addf %28, %6 : vector<32x128xf32>
      %cst_21 = arith.constant 0.000000e+00 : f32
      %30 = vector.broadcast %cst_21 : f32 to vector<32x128xf32>
      %31 = arith.maximumf %29, %30 : vector<32x128xf32>
      %cst_22 = arith.constant dense<0.000000e+00> : vector<32x128xf32>
      %32 = tpu.matmul %12, %31, %cst_22 {dimension_numbers = #tpu.dot_dimension_numbers<[1], [0], [0], [1], [0, 0, 1, 1], [], []>} : vector<32x32xf32>, vector<32x128xf32>, vector<32x128xf32> -> vector<32x128xf32>
      %33 = vector.broadcast %13 : vector<32x1xf32> to vector<32x128xf32>
      %34 = arith.addf %32, %33 : vector<32x128xf32>
      %cst_23 = arith.constant 0.000000e+00 : f32
      %35 = vector.broadcast %cst_23 : f32 to vector<32x128xf32>
      %36 = arith.maximumf %34, %35 : vector<32x128xf32>
      %cst_24 = arith.constant dense<0.000000e+00> : vector<4x128xf32>
      %37 = tpu.matmul %14, %36, %cst_24 {dimension_numbers = #tpu.dot_dimension_numbers<[1], [0], [0], [1], [0, 0, 1, 1], [], []>} : vector<4x32xf32>, vector<32x128xf32>, vector<4x128xf32> -> vector<4x128xf32>
      %38 = vector.broadcast %15 : vector<4x1xf32> to vector<4x128xf32>
      %39 = arith.addf %37, %38 : vector<4x128xf32>
      %cst_25 = arith.constant 0.000000e+00 : f32
      %40 = vector.broadcast %cst_25 : f32 to vector<4x128xf32>
      %41 = arith.cmpf ogt, %39, %40 : vector<4x128xf32>
      %cst_26 = arith.constant 1.000000e+00 : f32
      %42 = vector.broadcast %cst_26 : f32 to vector<4x128xf32>
      %43 = arith.addf %39, %42 : vector<4x128xf32>
      %44 = math.exp %39 : vector<4x128xf32>
      %45 = arith.select %41, %43, %44 : vector<4x128xi1>, vector<4x128xf32>
      %46 = vector.broadcast %26 : f32 to vector<4x128xf32>
      %47 = arith.mulf %46, %45 : vector<4x128xf32>
      %48 = arith.addf %arg14, %47 : vector<4x128xf32>
      scf.yield %48 : vector<4x128xf32>
    }
    %c51_i32_18 = arith.constant 51 : i32
    %19 = vector.broadcast %0 : vector<1x128xf32> to vector<4x128xf32>
    %20 = arith.mulf %18, %19 : vector<4x128xf32>
    %21 = arith.addf %20, %1 : vector<4x128xf32>
    %c0_19 = arith.constant 0 : index
    %c0_20 = arith.constant 0 : index
    %22 = vector.load %arg12[%c0_19, %c0_20] : memref<4x128xf32, #tpu.memory_space<vmem>>, vector<4x128xf32>
    tpu.vector_store %arg12[%c0_19, %c0_20], %21 {strides = array<i32>} : memref<4x128xf32, #tpu.memory_space<vmem>>, vector<4x128xf32>,
    return
  }
  func.func @transform_0(%arg0: i32) -> i32 {
    %c0_i32 = arith.constant 0 : i32
    %c0_i32_0 = arith.constant 0 : i32
    return %c0_i32 : i32
  }
  func.func @transform_1(%arg0: i32) -> i32 {
    %c0_i32 = arith.constant 0 : i32
    %c0_i32_0 = arith.constant 0 : i32
    return %c0_i32 : i32
  }
  func.func @transform_2(%arg0: i32) -> (i32, i32) {
    %c0_i32 = arith.constant 0 : i32
    %c0_i32_0 = arith.constant 0 : i32
    return %c0_i32, %arg0 : i32, i32
  }
  func.func @transform_3(%arg0: i32) -> (i32, i32) {
    %c0_i32 = arith.constant 0 : i32
    %c0_i32_0 = arith.constant 0 : i32
    return %c0_i32, %arg0 : i32, i32
  }
  func.func @transform_4(%arg0: i32) -> (i32, i32) {
    %c0_i32 = arith.constant 0 : i32
    %c0_i32_0 = arith.constant 0 : i32
    %c0_i32_1 = arith.constant 0 : i32
    return %c0_i32, %c0_i32_0 : i32, i32
  }
  func.func @transform_5(%arg0: i32) -> (i32, i32) {
    %c0_i32 = arith.constant 0 : i32
    %c0_i32_0 = arith.constant 0 : i32
    %c0_i32_1 = arith.constant 0 : i32
    return %c0_i32, %c0_i32_0 : i32, i32
  }
  func.func @transform_6(%arg0: i32) -> (i32, i32) {
    %c0_i32 = arith.constant 0 : i32
    %c0_i32_0 = arith.constant 0 : i32
    %c0_i32_1 = arith.constant 0 : i32
    return %c0_i32, %c0_i32_0 : i32, i32
  }
  func.func @transform_7(%arg0: i32) -> (i32, i32) {
    %c0_i32 = arith.constant 0 : i32
    %c0_i32_0 = arith.constant 0 : i32
    %c0_i32_1 = arith.constant 0 : i32
    return %c0_i32, %c0_i32_0 : i32, i32
  }
  func.func @transform_8(%arg0: i32) -> (i32, i32) {
    %c0_i32 = arith.constant 0 : i32
    %c0_i32_0 = arith.constant 0 : i32
    %c0_i32_1 = arith.constant 0 : i32
    return %c0_i32, %c0_i32_0 : i32, i32
  }
  func.func @transform_9(%arg0: i32) -> (i32, i32) {
    %c0_i32 = arith.constant 0 : i32
    %c0_i32_0 = arith.constant 0 : i32
    %c0_i32_1 = arith.constant 0 : i32
    return %c0_i32, %c0_i32_0 : i32, i32
  }
  func.func @transform_10(%arg0: i32) -> (i32, i32) {
    %c0_i32 = arith.constant 0 : i32
    %c0_i32_0 = arith.constant 0 : i32
    %c0_i32_1 = arith.constant 0 : i32
    return %c0_i32, %c0_i32_0 : i32, i32
  }
  func.func @transform_11(%arg0: i32) -> (i32, i32) {
    %c0_i32 = arith.constant 0 : i32
    %c0_i32_0 = arith.constant 0 : i32
    return %c0_i32, %arg0 : i32, i32
  }
}

</mosaic_0001>

<llo_original>
// kernel: tpu_custom_call.1
$region0: #{tpu_custom_call.1}
  #allocation0 [shape = 'u32[]', space=smem, size = 0x4, offset = 0x4, fixed_abs, tag = 'smem constant byte address 0x4 - core index']
  #allocation1 [shape = 'u32[144,128]{1,0:T(1,128)}', space=vmem, size = 0x12000, scoped, tag = 'internal scratch']
  %s0 = inlined_call_operand.vmem [shape: f32[51], index: 0, kind: input, shape index: {}]
  %s1 = inlined_call_operand.vmem [shape: f32[51], index: 1, kind: input, shape index: {}]
  %s2 = inlined_call_operand.vmem [shape: f32[1,256], index: 2, kind: input, shape index: {}]
  %s3 = inlined_call_operand.vmem [shape: f32[4,256], index: 3, kind: input, shape index: {}]
  %s4 = inlined_call_operand.vmem [shape: f32[32,1], index: 4, kind: input, shape index: {}]
  %s5 = inlined_call_operand.vmem [shape: f32[32,4], index: 5, kind: input, shape index: {}]
  %s6 = inlined_call_operand.vmem [shape: f32[32,1], index: 6, kind: input, shape index: {}]
  %s7 = inlined_call_operand.vmem [shape: f32[32,32], index: 7, kind: input, shape index: {}]
  %s8 = inlined_call_operand.vmem [shape: f32[32,1], index: 8, kind: input, shape index: {}]
  %s9 = inlined_call_operand.vmem [shape: f32[4,32], index: 9, kind: input, shape index: {}]
  %s10 = inlined_call_operand.vmem [shape: f32[4,1], index: 10, kind: input, shape index: {}]
  %s11 = inlined_call_operand.hbm [shape: f32[4,256], index: 11, kind: output, shape index: {}]
  %s12 = sld [smem:[#allocation0]]
  $region92: #{tpu_custom_call.1} parent=0
    _
  %s14 = ssub.s32 1, %s12
  %s15 = scalar_select 0, %s14, %s12
  $region1: #{tpu_custom_call.1} parent=0
    #allocation2 [shape = 'u8[512]{0}', space=smem, size = 0x200, scoped, tag = 'input window, operand 0, single buffered']
    #allocation3 [shape = 's32[2]{0}', space=sflag, size = 0x8, scoped, tag = 'scoped memory for tpu_custom_call.1']
    #allocation4 [shape = 's32[2]{0}', space=sflag, size = 0x8, scoped, tag = 'scoped memory for tpu_custom_call.1']
    #allocation5 [shape = 'u8[512]{0}', space=smem, size = 0x200, scoped, tag = 'input window, operand 1, single buffered']
    #allocation6 [shape = 's32[1]{0}', space=sflag, size = 0x4, scoped, tag = 'scoped memory for tpu_custom_call.1']
    #allocation7 [shape = 'u8[4096]{0}', space=vmem, size = 0x1000, scoped, tag = 'output window, operand 0']
    %16 = vsyncpa [#allocation4], 0
    %17 = vsyncpa [#allocation6], 0
    %18 = vsyncpa [#allocation3], 0
    %s19 = scalar_lea.sflag [#allocation3], 1
    %20 = vsyncpa %s19, 0
    loop: start=0, step=1, limit=4
    $region2: #{tpu_custom_call.1} parent=1 // loop_pre_header
      _
    $region3: #{tpu_custom_call.1} parent=1 // loop_header
      %s22 = sphi 0, %s26
      %p23 = scmp.ge.s32.totalorder %s22, 4
      %s30 = sphi 0, %s30
      %s32 = sphi 0, %s30
      %s33 = sphi 0, %s32
      %s47 = sphi 0, %s33
      %s51 = sphi 0, %s51
      %s53 = sphi 0, %s51
      %s54 = sphi 0, %s53
      %s68 = sphi 0, %s54
      %s74 = sphi 0, %s76
      %s77 = sphi 0, %s74
      %s78 = sphi 0, %s77
      %s94 = sphi 0, %s78
      %s100 = sphi 0, %s102
      %s103 = sphi 0, %s100
      %s104 = sphi 0, %s103
      %s120 = sphi 0, %s104
      %s124 = sphi 0, %s124
      %s126 = sphi 0, %s124
      %s127 = sphi 0, %s126
      %s141 = sphi 0, %s127
      %s145 = sphi 0, %s145
      %s147 = sphi 0, %s145
      %s148 = sphi 0, %s147
      %s162 = sphi 0, %s148
      %s166 = sphi 0, %s166
      %s168 = sphi 0, %s166
      %s169 = sphi 0, %s168
      %s183 = sphi 0, %s169
      %s187 = sphi 0, %s187
      %s189 = sphi 0, %s187
      %s190 = sphi 0, %s189
      %s204 = sphi 0, %s190
      %s208 = sphi 0, %s208
      %s210 = sphi 0, %s208
      %s211 = sphi 0, %s210
      %s225 = sphi 0, %s211
      %s229 = sphi 0, %s229
      %s231 = sphi 0, %s229
      %s232 = sphi 0, %s231
      %s246 = sphi 0, %s232
      %s250 = sphi 0, %s250
      %s252 = sphi 0, %s250
      %s253 = sphi 0, %s252
      %s267 = sphi 0, %s253
      %s273 = sphi 0, %s275
      %s276 = sphi 0, %s273
      %s277 = sphi 0, %s276
      %s293 = sphi 0, %s277
    $region4: #{tpu_custom_call.1} parent=1 // loop_header_branch
      %25 = sbr.rel (%p23) target = $region8
    $region5: #{tpu_custom_call.1} parent=1 // loop_body
      %s27 = ssub.s32 %s22, 1
      %s28 = ssub.s32 %s22, 2
      %s29 = sadd.s32 %s22, 1
      %s31 = sadd.s32 %s30, 1
      %p34 = scmp.eq.s32.totalorder %s22, 1
      %p35 = scmp.ne.s32.totalorder %s30, %s32
      %p36 = scmp.eq.s32.totalorder %s22, 0
      %p37 = por %p35, %p36
      %p38 = scmp.ne.s32.totalorder %s30, %s32
      %p39 = scmp.eq.s32.totalorder %s27, 1
      %p40 = por %p38, %p39
      %p41 = scmp.ne.s32.totalorder %s32, %s33
      %p42 = scmp.eq.s32.totalorder %s27, 0
      %p43 = por %p41, %p42
      %p44 = scmp.ne.s32.totalorder %s32, %s33
      %p45 = scmp.eq.s32.totalorder %s28, 1
      %p46 = por %p44, %p45
      %p48 = scmp.ne.s32.totalorder %s33, %s47
      %p49 = scmp.eq.s32.totalorder %s28, 0
      %p50 = por %p48, %p49
      %s52 = sadd.s32 %s51, 1
      %p55 = scmp.eq.s32.totalorder %s22, 1
      %p56 = scmp.ne.s32.totalorder %s51, %s53
      %p57 = scmp.eq.s32.totalorder %s22, 0
      %p58 = por %p56, %p57
      %p59 = scmp.ne.s32.totalorder %s51, %s53
      %p60 = scmp.eq.s32.totalorder %s27, 1
      %p61 = por %p59, %p60
      %p62 = scmp.ne.s32.totalorder %s53, %s54
      %p63 = scmp.eq.s32.totalorder %s27, 0
      %p64 = por %p62, %p63
      %p65 = scmp.ne.s32.totalorder %s53, %s54
      %p66 = scmp.eq.s32.totalorder %s28, 1
      %p67 = por %p65, %p66
      %p69 = scmp.ne.s32.totalorder %s54, %s68
      %p70 = scmp.eq.s32.totalorder %s28, 0
      %p71 = por %p69, %p70
      %s72 = ssub.s32 %s22, %s29
      %p73 = scmp.eq.s32.totalorder %s72, 0
      %s75 = sadd.s32 %s74, 1
      %s76 = scalar_select %p73, %s74, %s75
      %p79 = pneg %p73
      %p80 = scmp.eq.s32.totalorder %s22, 1
      %p81 = por %p79, %p80
      %p82 = scmp.ne.s32.totalorder %s74, %s77
      %p83 = scmp.eq.s32.totalorder %s22, 0
      %p84 = por %p82, %p83
      %p85 = scmp.ne.s32.totalorder %s74, %s77
      %p86 = scmp.eq.s32.totalorder %s27, 1
      %p87 = por %p85, %p86
      %p88 = scmp.ne.s32.totalorder %s77, %s78
      %p89 = scmp.eq.s32.totalorder %s27, 0
      %p90 = por %p88, %p89
      %p91 = scmp.ne.s32.totalorder %s77, %s78
      %p92 = scmp.eq.s32.totalorder %s28, 1
      %p93 = por %p91, %p92
      %p95 = scmp.ne.s32.totalorder %s78, %s94
      %p96 = scmp.eq.s32.totalorder %s28, 0
      %p97 = por %p95, %p96
      %s98 = ssub.s32 %s22, %s29
      %p99 = scmp.eq.s32.totalorder %s98, 0
      %s101 = sadd.s32 %s100, 1
      %s102 = scalar_select %p99, %s100, %s101
      %p105 = pneg %p99
      %p106 = scmp.eq.s32.totalorder %s22, 1
      %p107 = por %p105, %p106
      %p108 = scmp.ne.s32.totalorder %s100, %s103
      %p109 = scmp.eq.s32.totalorder %s22, 0
      %p110 = por %p108, %p109
      %p111 = scmp.ne.s32.totalorder %s100, %s103
      %p112 = scmp.eq.s32.totalorder %s27, 1
      %p113 = por %p111, %p112
      %p114 = scmp.ne.s32.totalorder %s103, %s104
      %p115 = scmp.eq.s32.totalorder %s27, 0
      %p116 = por %p114, %p115
      %p117 = scmp.ne.s32.totalorder %s103, %s104
      %p118 = scmp.eq.s32.totalorder %s28, 1
      %p119 = por %p117, %p118
      %p121 = scmp.ne.s32.totalorder %s104, %s120
      %p122 = scmp.eq.s32.totalorder %s28, 0
      %p123 = por %p121, %p122
      %s125 = sadd.s32 %s124, 1
      %p128 = scmp.eq.s32.totalorder %s22, 1
      %p129 = scmp.ne.s32.totalorder %s124, %s126
      %p130 = scmp.eq.s32.totalorder %s22, 0
      %p131 = por %p129, %p130
      %p132 = scmp.ne.s32.totalorder %s124, %s126
      %p133 = scmp.eq.s32.totalorder %s27, 1
      %p134 = por %p132, %p133
      %p135 = scmp.ne.s32.totalorder %s126, %s127
      %p136 = scmp.eq.s32.totalorder %s27, 0
      %p137 = por %p135, %p136
      %p138 = scmp.ne.s32.totalorder %s126, %s127
      %p139 = scmp.eq.s32.totalorder %s28, 1
      %p140 = por %p138, %p139
      %p142 = scmp.ne.s32.totalorder %s127, %s141
      %p143 = scmp.eq.s32.totalorder %s28, 0
      %p144 = por %p142, %p143
      %s146 = sadd.s32 %s145, 1
      %p149 = scmp.eq.s32.totalorder %s22, 1
      %p150 = scmp.ne.s32.totalorder %s145, %s147
      %p151 = scmp.eq.s32.totalorder %s22, 0
      %p152 = por %p150, %p151
      %p153 = scmp.ne.s32.totalorder %s145, %s147
      %p154 = scmp.eq.s32.totalorder %s27, 1
      %p155 = por %p153, %p154
      %p156 = scmp.ne.s32.totalorder %s147, %s148
      %p157 = scmp.eq.s32.totalorder %s27, 0
      %p158 = por %p156, %p157
      %p159 = scmp.ne.s32.totalorder %s147, %s148
      %p160 = scmp.eq.s32.totalorder %s28, 1
      %p161 = por %p159, %p160
      %p163 = scmp.ne.s32.totalorder %s148, %s162
      %p164 = scmp.eq.s32.totalorder %s28, 0
      %p165 = por %p163, %p164
      %s167 = sadd.s32 %s166, 1
      %p170 = scmp.eq.s32.totalorder %s22, 1
      %p171 = scmp.ne.s32.totalorder %s166, %s168
      %p172 = scmp.eq.s32.totalorder %s22, 0
      %p173 = por %p171, %p172
      %p174 = scmp.ne.s32.totalorder %s166, %s168
      %p175 = scmp.eq.s32.totalorder %s27, 1
      %p176 = por %p174, %p175
      %p177 = scmp.ne.s32.totalorder %s168, %s169
      %p178 = scmp.eq.s32.totalorder %s27, 0
      %p179 = por %p177, %p178
      %p180 = scmp.ne.s32.totalorder %s168, %s169
      %p181 = scmp.eq.s32.totalorder %s28, 1
      %p182 = por %p180, %p181
      %p184 = scmp.ne.s32.totalorder %s169, %s183
      %p185 = scmp.eq.s32.totalorder %s28, 0
      %p186 = por %p184, %p185
      %s188 = sadd.s32 %s187, 1
      %p191 = scmp.eq.s32.totalorder %s22, 1
      %p192 = scmp.ne.s32.totalorder %s187, %s189
      %p193 = scmp.eq.s32.totalorder %s22, 0
      %p194 = por %p192, %p193
      %p195 = scmp.ne.s32.totalorder %s187, %s189
      %p196 = scmp.eq.s32.totalorder %s27, 1
      %p197 = por %p195, %p196
      %p198 = scmp.ne.s32.totalorder %s189, %s190
      %p199 = scmp.eq.s32.totalorder %s27, 0
      %p200 = por %p198, %p199
      %p201 = scmp.ne.s32.totalorder %s189, %s190
      %p202 = scmp.eq.s32.totalorder %s28, 1
      %p203 = por %p201, %p202
      %p205 = scmp.ne.s32.totalorder %s190, %s204
      %p206 = scmp.eq.s32.totalorder %s28, 0
      %p207 = por %p205, %p206
      %s209 = sadd.s32 %s208, 1
      %p212 = scmp.eq.s32.totalorder %s22, 1
      %p213 = scmp.ne.s32.totalorder %s208, %s210
      %p214 = scmp.eq.s32.totalorder %s22, 0
      %p215 = por %p213, %p214
      %p216 = scmp.ne.s32.totalorder %s208, %s210
      %p217 = scmp.eq.s32.totalorder %s27, 1
      %p218 = por %p216, %p217
      %p219 = scmp.ne.s32.totalorder %s210, %s211
      %p220 = scmp.eq.s32.totalorder %s27, 0
      %p221 = por %p219, %p220
      %p222 = scmp.ne.s32.totalorder %s210, %s211
      %p223 = scmp.eq.s32.totalorder %s28, 1
      %p224 = por %p222, %p223
      %p226 = scmp.ne.s32.totalorder %s211, %s225
      %p227 = scmp.eq.s32.totalorder %s28, 0
      %p228 = por %p226, %p227
      %s230 = sadd.s32 %s229, 1
      %p233 = scmp.eq.s32.totalorder %s22, 1
      %p234 = scmp.ne.s32.totalorder %s229, %s231
      %p235 = scmp.eq.s32.totalorder %s22, 0
      %p236 = por %p234, %p235
      %p237 = scmp.ne.s32.totalorder %s229, %s231
      %p238 = scmp.eq.s32.totalorder %s27, 1
      %p239 = por %p237, %p238
      %p240 = scmp.ne.s32.totalorder %s231, %s232
      %p241 = scmp.eq.s32.totalorder %s27, 0
      %p242 = por %p240, %p241
      %p243 = scmp.ne.s32.totalorder %s231, %s232
      %p244 = scmp.eq.s32.totalorder %s28, 1
      %p245 = por %p243, %p244
      %p247 = scmp.ne.s32.totalorder %s232, %s246
      %p248 = scmp.eq.s32.totalorder %s28, 0
      %p249 = por %p247, %p248
      %s251 = sadd.s32 %s250, 1
      %p254 = scmp.eq.s32.totalorder %s22, 1
      %p255 = scmp.ne.s32.totalorder %s250, %s252
      %p256 = scmp.eq.s32.totalorder %s22, 0
      %p257 = por %p255, %p256
      %p258 = scmp.ne.s32.totalorder %s250, %s252
      %p259 = scmp.eq.s32.totalorder %s27, 1
      %p260 = por %p258, %p259
      %p261 = scmp.ne.s32.totalorder %s252, %s253
      %p262 = scmp.eq.s32.totalorder %s27, 0
      %p263 = por %p261, %p262
      %p264 = scmp.ne.s32.totalorder %s252, %s253
      %p265 = scmp.eq.s32.totalorder %s28, 1
      %p266 = por %p264, %p265
      %p268 = scmp.ne.s32.totalorder %s253, %s267
      %p269 = scmp.eq.s32.totalorder %s28, 0
      %p270 = por %p268, %p269
      %s271 = ssub.s32 %s22, %s29
      %p272 = scmp.eq.s32.totalorder %s271, 0
      %s274 = sadd.s32 %s273, 1
      %s275 = scalar_select %p272, %s273, %s274
      %p278 = pneg %p272
      %p279 = scmp.eq.s32.totalorder %s22, 1
      %p280 = por %p278, %p279
      %p281 = scmp.ne.s32.totalorder %s273, %s276
      %p282 = scmp.eq.s32.totalorder %s22, 0
      %p283 = por %p281, %p282
      %p284 = scmp.ne.s32.totalorder %s273, %s276
      %p285 = scmp.eq.s32.totalorder %s27, 1
      %p286 = por %p284, %p285
      %p287 = scmp.ne.s32.totalorder %s276, %s277
      %p288 = scmp.eq.s32.totalorder %s27, 0
      %p289 = por %p287, %p288
      %p290 = scmp.ne.s32.totalorder %s276, %s277
      %p291 = scmp.eq.s32.totalorder %s28, 1
      %p292 = por %p290, %p291
      %p294 = scmp.ne.s32.totalorder %s277, %s293
      %p295 = scmp.eq.s32.totalorder %s28, 0
      %p296 = por %p294, %p295
      %p297 = scmp.le.s32.totalorder 1, %s22
      %p298 = scmp.lt.s32.totalorder %s22, 3
      %p299 = pnand %p297, %p298
      %p300 = pneg %p299
      // Predicated region
      $region9: #{tpu_custom_call.1} parent=5 // pred_check
        _
      $region10: #{tpu_custom_call.1} parent=5 // pred_check_branch
        %302 = sbr.rel (%p299) target = $region12
      $region11: #{tpu_custom_call.1} parent=5 // pred_region
        %s303 = ssub.s32 %s22, 1
        // Predicated region
        $region13: #{tpu_custom_call.1} parent=11 // pred_check
          %p304 = pneg %p43
        $region14: #{tpu_custom_call.1} parent=11 // pred_check_branch
          %306 = sbr.rel (%p304) target = $region16
        $region15: #{tpu_custom_call.1} parent=11 // pred_region
          %s308 = ssub.s32 16, 16
          %309 = vsyncadd [#allocation4], %s308
          %s311 = sshll.u32 %s0, 4
          %s312 = int_to_ptr.vmem [resolvable:$true] %s311
          %314 = dma.vmem_to_smem %s312, 16, [#allocation2], [#allocation4]
        $region16: #{tpu_custom_call.1} parent=11 // pred_fallthru
          _
        // Predicated region
        $region17: #{tpu_custom_call.1} parent=11 // pred_check
          %p315 = pneg %p64
        $region18: #{tpu_custom_call.1} parent=11 // pred_check_branch
          %317 = sbr.rel (%p315) target = $region20
        $region19: #{tpu_custom_call.1} parent=11 // pred_region
          %s319 = ssub.s32 16, 16
          %320 = vsyncadd [#allocation6], %s319
          %s322 = sshll.u32 %s1, 4
          %s323 = int_to_ptr.vmem [resolvable:$true] %s322
          %325 = dma.vmem_to_smem %s323, 16, [#allocation5], [#allocation6]
        $region20: #{tpu_custom_call.1} parent=11 // pred_fallthru
          _
        // Predicated region
        $region21: #{tpu_custom_call.1} parent=11 // pred_check
          %p326 = pneg %p137
        $region22: #{tpu_custom_call.1} parent=11 // pred_check_branch
          %328 = sbr.rel (%p326) target = $region24
        $region23: #{tpu_custom_call.1} parent=11 // pred_region
          _
        $region24: #{tpu_custom_call.1} parent=11 // pred_fallthru
          _
        // Predicated region
        $region25: #{tpu_custom_call.1} parent=11 // pred_check
          %p329 = pneg %p158
        $region26: #{tpu_custom_call.1} parent=11 // pred_check_branch
          %331 = sbr.rel (%p329) target = $region28
        $region27: #{tpu_custom_call.1} parent=11 // pred_region
          _
        $region28: #{tpu_custom_call.1} parent=11 // pred_fallthru
          _
        // Predicated region
        $region29: #{tpu_custom_call.1} parent=11 // pred_check
          %p332 = pneg %p179
        $region30: #{tpu_custom_call.1} parent=11 // pred_check_branch
          %334 = sbr.rel (%p332) target = $region32
        $region31: #{tpu_custom_call.1} parent=11 // pred_region
          _
        $region32: #{tpu_custom_call.1} parent=11 // pred_fallthru
          _
        // Predicated region
        $region33: #{tpu_custom_call.1} parent=11 // pred_check
          %p335 = pneg %p200
        $region34: #{tpu_custom_call.1} parent=11 // pred_check_branch
          %337 = sbr.rel (%p335) target = $region36
        $region35: #{tpu_custom_call.1} parent=11 // pred_region
          _
        $region36: #{tpu_custom_call.1} parent=11 // pred_fallthru
          _
        // Predicated region
        $region37: #{tpu_custom_call.1} parent=11 // pred_check
          %p338 = pneg %p221
        $region38: #{tpu_custom_call.1} parent=11 // pred_check_branch
          %340 = sbr.rel (%p338) target = $region40
        $region39: #{tpu_custom_call.1} parent=11 // pred_region
          _
        $region40: #{tpu_custom_call.1} parent=11 // pred_fallthru
          _
        // Predicated region
        $region41: #{tpu_custom_call.1} parent=11 // pred_check
          %p341 = pneg %p242
        $region42: #{tpu_custom_call.1} parent=11 // pred_check_branch
          %343 = sbr.rel (%p341) target = $region44
        $region43: #{tpu_custom_call.1} parent=11 // pred_region
          _
        $region44: #{tpu_custom_call.1} parent=11 // pred_fallthru
          _
        // Predicated region
        $region45: #{tpu_custom_call.1} parent=11 // pred_check
          %p344 = pneg %p263
        $region46: #{tpu_custom_call.1} parent=11 // pred_check_branch
          %346 = sbr.rel (%p344) target = $region48
        $region47: #{tpu_custom_call.1} parent=11 // pred_region
          _
        $region48: #{tpu_custom_call.1} parent=11 // pred_fallthru
          _
      $region12: #{tpu_custom_call.1} parent=5 // pred_fallthru
        _
      %p347 = scmp.lt.s32.totalorder %s22, 2
      // Predicated region
      $region49: #{tpu_custom_call.1} parent=5 // pred_check
        %p348 = pneg %p347
      $region50: #{tpu_custom_call.1} parent=5 // pred_check_branch
        %350 = sbr.rel (%p348) target = $region52
      $region51: #{tpu_custom_call.1} parent=5 // pred_region
        // Predicated region
        $region53: #{tpu_custom_call.1} parent=51 // pred_check
          %p351 = pneg %p84
        $region54: #{tpu_custom_call.1} parent=51 // pred_check_branch
          %353 = sbr.rel (%p351) target = $region56
        $region55: #{tpu_custom_call.1} parent=51 // pred_region
          %p354 = scmp.lt.s32.totalorder %s22, 1
          %s355 = scalar_select %p354, %s22, 1
          %s356 = scalar_lea.vmem %s2, %s355
        $region56: #{tpu_custom_call.1} parent=51 // pred_fallthru
          _
        // Predicated region
        $region57: #{tpu_custom_call.1} parent=51 // pred_check
          %p357 = pneg %p110
        $region58: #{tpu_custom_call.1} parent=51 // pred_check_branch
          %359 = sbr.rel (%p357) target = $region60
        $region59: #{tpu_custom_call.1} parent=51 // pred_region
          %p360 = scmp.lt.s32.totalorder %s22, 1
          %s361 = scalar_select %p360, %s22, 1
          %s362 = smul.addr %s361, 4
          %s363 = scalar_lea.vmem %s3, %s362
        $region60: #{tpu_custom_call.1} parent=51 // pred_fallthru
          _
      $region52: #{tpu_custom_call.1} parent=5 // pred_fallthru
        _
      %p364 = scmp.le.s32.totalorder 1, %s22
      %p365 = scmp.lt.s32.totalorder %s22, 3
      %p366 = pnand %p364, %p365
      %p367 = pneg %p366
      // Predicated region
      $region61: #{tpu_custom_call.1} parent=5 // pred_check
        _
      $region62: #{tpu_custom_call.1} parent=5 // pred_check_branch
        %369 = sbr.rel (%p366) target = $region64
      $region63: #{tpu_custom_call.1} parent=5 // pred_region
        %s370 = ssub.s32 %s22, 1
        // Predicated region
        $region65: #{tpu_custom_call.1} parent=63 // pred_check
          %p371 = pneg %p43
        $region66: #{tpu_custom_call.1} parent=63 // pred_check_branch
          %373 = sbr.rel (%p371) target = $region68
        $region67: #{tpu_custom_call.1} parent=63 // pred_region
          %374 = dma.done [#allocation4], 16
        $region68: #{tpu_custom_call.1} parent=63 // pred_fallthru
          _
        // Predicated region
        $region69: #{tpu_custom_call.1} parent=63 // pred_check
          %p375 = pneg %p64
        $region70: #{tpu_custom_call.1} parent=63 // pred_check_branch
          %377 = sbr.rel (%p375) target = $region72
        $region71: #{tpu_custom_call.1} parent=63 // pred_region
          %378 = dma.done [#allocation6], 16
        $region72: #{tpu_custom_call.1} parent=63 // pred_fallthru
          _
        %379 = sfence
        %p380 = pneg %p43
        %p381 = pneg %p40
        %p382 = pneg %p64
        %p383 = pneg %p61
        %p384 = scmp.lt.s32.totalorder %s27, 1
        %s385 = scalar_select %p384, %s27, 1
        %s386 = scalar_lea.vmem %s2, %s385
        %p387 = pneg %p90
        %p388 = pneg %p87
        %p389 = scmp.lt.s32.totalorder %s27, 1
        %s390 = scalar_select %p389, %s27, 1
        %s391 = smul.addr %s390, 4
        %s392 = scalar_lea.vmem %s3, %s391
        %p393 = pneg %p116
        %p394 = pneg %p113
        %p395 = pneg %p137
        %p396 = pneg %p134
        %p397 = pneg %p158
        %p398 = pneg %p155
        %p399 = pneg %p179
        %p400 = pneg %p176
        %p401 = pneg %p200
        %p402 = pneg %p197
        %p403 = pneg %p221
        %p404 = pneg %p218
        %p405 = pneg %p242
        %p406 = pneg %p239
        %p407 = pneg %p263
        %p408 = pneg %p260
        %p409 = pneg %p289
        %p410 = pneg %p286
        %s411 = sand.u32 %s276, 1
        %s412 = scalar_lea.sflag [#allocation3], %s411
        %s413 = sand.u32 %s276, 1
        %s414 = smul.addr %s413, 4
        %s415 = scalar_lea.vmem [#allocation7], %s414
        %p416 = scmp.lt.s32.totalorder %s27, 1
        %s417 = scalar_select %p416, %s27, 1
        %s418 = scalar_lea.vmem %s2, %s417
        %p419 = scmp.lt.s32.totalorder %s27, 1
        %s420 = scalar_select %p419, %s27, 1
        %s421 = smul.addr %s420, 4
        %s422 = scalar_lea.vmem %s3, %s421
        %v423 = vld [vmem:[%s418] sm:$0x1]
        %v424 = vld [vmem:[%s422] sm:$0xf]
        %v425 = vld [vmem:[%s5] sm:$0xff]
        %v426 = vld [vmem:[%s5 + $0x8] sm:$0xff]
        %v427 = vld [vmem:[%s5 + $0x10] sm:$0xff]
        %v428 = vld [vmem:[%s5 + $0x18] sm:$0xff]
        %v429 = vld [vmem:[%s6] sm:$0xff]
        %v430 = vld [vmem:[%s6 + $0x8] sm:$0xff]
        %v431 = vld [vmem:[%s6 + $0x10] sm:$0xff]
        %v432 = vld [vmem:[%s6 + $0x18] sm:$0xff]
        %434 = vset.pattern.permute.xlu0 0
        %435 = vperm.xlu0 %434, %v429
        %v436 = vpop.permute.xlu0 %435
        %439 = vset.pattern.permute.xlu0 0
        %440 = vperm.xlu0 %439, %v430
        %v441 = vpop.permute.xlu0 %440
        %444 = vset.pattern.permute.xlu0 0
        %445 = vperm.xlu0 %444, %v431
        %v446 = vpop.permute.xlu0 %445
        %449 = vset.pattern.permute.xlu0 0
        %450 = vperm.xlu0 %449, %v432
        %v451 = vpop.permute.xlu0 %450
        %vm453 = vcmask 31744
        %v455 = vsel %vm453, %v425, 0
        %v458 = vsel %vm453, %v426, 0
        %v461 = vsel %vm453, %v427, 0
        %v464 = vsel %vm453, %v428, 0
        %vm466 = vcmask 1043456
        %v468 = vsel %vm466, %v424, 0
        %470 = vmatprep.subr.mxu0 0.0
        %471 = vmatpush1.msra.mxu0 0.0
        %472 = vmatprep.subr.mxu0 0.0
        %473 = vmatpush1.msra.mxu0 0.0
        %474 = vmatprep.subr.mxu0 0.0
        %475 = vmatpush1.msra.mxu0 0.0
        %476 = vmatprep.subr.mxu0 0.0
        %477 = vmatpush1.msra.mxu0 0.0
        %478 = vmatprep.subr.mxu0 0.0
        %479 = vmatpush1.msra.mxu0 0.0
        %480 = vmatprep.subr.mxu0 0.0
        %481 = vmatpush1.msra.mxu0 0.0
        %482 = vmatprep.subr.mxu0 0.0
        %483 = vmatpush1.msra.mxu0 0.0
        %484 = vmatprep.subr.mxu0 0.0
        %485 = vmatpush1.msra.mxu0 0.0
        %486 = vmatprep.subr.mxu0 0.0
        %487 = vmatpush1.msra.mxu0 0.0
        %488 = vmatprep.subr.mxu0 0.0
        %489 = vmatpush1.msra.mxu0 0.0
        %490 = vmatprep.subr.mxu0 0.0
        %491 = vmatpush1.msra.mxu0 0.0
        %492 = vmatprep.subr.mxu0 0.0
        %493 = vmatpush1.msra.mxu0 0.0
        %494 = vmatprep.subr.mxu0 0.0
        %495 = vmatpush1.msra.mxu0 0.0
        %496 = vmatprep.subr.mxu0 0.0
        %497 = vmatpush1.msra.mxu0 0.0
        %498 = vmatprep.subr.mxu0 0.0
        %499 = vmatpush1.msra.mxu0 0.0
        %500 = vmatprep.subr.mxu0 0.0
        %501 = vmatpush1.msra.mxu0 %v468
        %502 = vmatprep.subr.mxu0 0.0
        %503 = vmatpush2.msra.mxu0 0.0
        %504 = vmatprep.subr.mxu0 0.0
        %505 = vmatpush2.msra.mxu0 0.0
        %506 = vmatprep.subr.mxu0 0.0
        %507 = vmatpush2.msra.mxu0 0.0
        %508 = vmatprep.subr.mxu0 0.0
        %509 = vmatpush2.msra.mxu0 0.0
        %510 = vmatprep.subr.mxu0 0.0
        %511 = vmatpush2.msra.mxu0 0.0
        %512 = vmatprep.subr.mxu0 0.0
        %513 = vmatpush2.msra.mxu0 0.0
        %514 = vmatprep.subr.mxu0 0.0
        %515 = vmatpush2.msra.mxu0 0.0
        %516 = vmatprep.subr.mxu0 0.0
        %517 = vmatpush2.msra.mxu0 0.0
        %518 = vmatprep.subr.mxu0 0.0
        %519 = vmatpush2.msra.mxu0 0.0
        %520 = vmatprep.subr.mxu0 0.0
        %521 = vmatpush2.msra.mxu0 0.0
        %522 = vmatprep.subr.mxu0 0.0
        %523 = vmatpush2.msra.mxu0 0.0
        %524 = vmatprep.subr.mxu0 0.0
        %525 = vmatpush2.msra.mxu0 0.0
        %526 = vmatprep.subr.mxu0 0.0
        %527 = vmatpush2.msra.mxu0 0.0
        %528 = vmatprep.subr.mxu0 0.0
        %529 = vmatpush2.msra.mxu0 0.0
        %530 = vmatprep.subr.mxu0 0.0
        %531 = vmatpush2.msra.mxu0 0.0
        %532 = vmatprep.subr.mxu0 0.0
        %533 = vmatpush2.msra.mxu0 0.0
        %534 = vmatprep.mubr.f32.mxu0 0.0
        %535 = vmatmul.mubr.f32.gmra.mxu0 %v455
        %v536 = vpop.f32.mrf.mxu0
        %v537 = vadd.f32 %v436, %v536
        %v538 = vpop.f32.mrf.mxu0
        %539 = vmatprep.mubr.f32.mxu0 0.0
        %540 = vmatmul.mubr.f32.gmra.mxu0 %v458
        %v541 = vpop.f32.mrf.mxu0
        %v542 = vadd.f32 %v441, %v541
        %v543 = vpop.f32.mrf.mxu0
        %544 = vmatprep.mubr.f32.mxu0 0.0
        %545 = vmatmul.mubr.f32.gmra.mxu0 %v461
        %v546 = vpop.f32.mrf.mxu0
        %v547 = vadd.f32 %v446, %v546
        %v548 = vpop.f32.mrf.mxu0
        %549 = vmatprep.mubr.f32.mxu0 0.0
        %550 = vmatmul.mubr.f32.gmra.mxu0 %v464
        %v551 = vpop.f32.mrf.mxu0
        %v552 = vadd.f32 %v451, %v551
        %v553 = vpop.f32.mrf.mxu0
        %554 = vdwg.mxu0
        %v555 = vld [vmem:[%s4] sm:$0xff]
        %v556 = vld [vmem:[%s4 + $0x8] sm:$0xff]
        %v557 = vld [vmem:[%s4 + $0x10] sm:$0xff]
        %v558 = vld [vmem:[%s4 + $0x18] sm:$0xff]
        %560 = vset.pattern.permute.xlu0 0
        %561 = vperm.xlu0 %560, %v555
        %v562 = vpop.permute.xlu0 %561
        %565 = vset.pattern.permute.xlu0 0
        %566 = vperm.xlu0 %565, %v556
        %v567 = vpop.permute.xlu0 %566
        %570 = vset.pattern.permute.xlu0 0
        %571 = vperm.xlu0 %570, %v557
        %v572 = vpop.permute.xlu0 %571
        %575 = vset.pattern.permute.xlu0 0
        %576 = vperm.xlu0 %575, %v558
        %v577 = vpop.permute.xlu0 %576
        %v580 = vlaneseq
        %v581 = vshrl.u32 %v580, 7
        %v582 = vsub.s32 0, %v581
        %v583 = vrot.slane %v423, %v582
        %v585 = vmul.f32 %v562, %v583
        %v586 = vmul.f32 %v567, %v583
        %v587 = vmul.f32 %v572, %v583
        %v588 = vmul.f32 %v577, %v583
        %v589 = vld [vmem:[%s7] sm:$0xff]
        %v590 = vld [vmem:[%s7 + $0x8] sm:$0xff]
        %v591 = vld [vmem:[%s7 + $0x10] sm:$0xff]
        %v592 = vld [vmem:[%s7 + $0x18] sm:$0xff]
        %v593 = vld [vmem:[%s8] sm:$0xff]
        %v594 = vld [vmem:[%s8 + $0x8] sm:$0xff]
        %v595 = vld [vmem:[%s8 + $0x10] sm:$0xff]
        %v596 = vld [vmem:[%s8 + $0x18] sm:$0xff]
        %v597 = vld [vmem:[%s9] sm:$0xf]
        %v598 = vld [vmem:[%s10] sm:$0xf]
        loop: start=0, step=1, limit=51
        $region73: #{tpu_custom_call.1} parent=63 // loop_pre_header
          _
        $region74: #{tpu_custom_call.1} parent=63 // loop_header
          %s600 = sphi 0, %s604
          %p601 = scmp.ge.s32.totalorder %s600, 51
          %v605 = vphi 0.0, %v828
        $region75: #{tpu_custom_call.1} parent=63 // loop_header_branch
          %603 = sbr.rel (%p601) target = $region79
        $region76: #{tpu_custom_call.1} parent=63 // loop_body
          %s606 = sld [smem:[#allocation2 + %s600]]
          %s607 = sld [smem:[#allocation5 + %s600]]
          %v608 = vstv %s606
          %v609 = vmul.f32 %v585, %v608
          %v610 = vmul.f32 %v586, %v608
          %v611 = vmul.f32 %v587, %v608
          %v612 = vmul.f32 %v588, %v608
          %v613 = vadd.f32 %v609, %v537
          %v614 = vadd.f32 %v610, %v542
          %v615 = vadd.f32 %v611, %v547
          %v616 = vadd.f32 %v612, %v552
          %v617 = vmax.f32 %v613, 0.0
          %v618 = vmax.f32 %v614, 0.0
          %v619 = vmax.f32 %v615, 0.0
          %v620 = vmax.f32 %v616, 0.0
          %622 = vset.pattern.permute.xlu0 0
          %623 = vperm.xlu0 %622, %v593
          %v624 = vpop.permute.xlu0 %623
          %627 = vset.pattern.permute.xlu0 0
          %628 = vperm.xlu0 %627, %v594
          %v629 = vpop.permute.xlu0 %628
          %632 = vset.pattern.permute.xlu0 0
          %633 = vperm.xlu0 %632, %v595
          %v634 = vpop.permute.xlu0 %633
          %637 = vset.pattern.permute.xlu0 0
          %638 = vperm.xlu0 %637, %v596
          %v639 = vpop.permute.xlu0 %638
          %vm641 = vcmask 261120
          %v643 = vsel %vm641, %v589, 0
          %v646 = vsel %vm641, %v590, 0
          %v649 = vsel %vm641, %v591, 0
          %v652 = vsel %vm641, %v592, 0
          %654 = vmatprep.subr.mxu0 0.0
          %655 = vmatpush1.msra.mxu0 0.0
          %656 = vmatprep.subr.mxu0 0.0
          %657 = vmatpush1.msra.mxu0 0.0
          %658 = vmatprep.subr.mxu0 0.0
          %659 = vmatpush1.msra.mxu0 0.0
          %660 = vmatprep.subr.mxu0 0.0
          %661 = vmatpush1.msra.mxu0 0.0
          %662 = vmatprep.subr.mxu0 0.0
          %663 = vmatpush1.msra.mxu0 0.0
          %664 = vmatprep.subr.mxu0 0.0
          %665 = vmatpush1.msra.mxu0 0.0
          %666 = vmatprep.subr.mxu0 0.0
          %667 = vmatpush1.msra.mxu0 0.0
          %668 = vmatprep.subr.mxu0 0.0
          %669 = vmatpush1.msra.mxu0 0.0
          %670 = vmatprep.subr.mxu0 0.0
          %671 = vmatpush1.msra.mxu0 0.0
          %672 = vmatprep.subr.mxu0 0.0
          %673 = vmatpush1.msra.mxu0 0.0
          %674 = vmatprep.subr.mxu0 0.0
          %675 = vmatpush1.msra.mxu0 0.0
          %676 = vmatprep.subr.mxu0 0.0
          %677 = vmatpush1.msra.mxu0 0.0
          %678 = vmatprep.subr.mxu0 0.0
          %679 = vmatpush1.msra.mxu0 %v620
          %680 = vmatprep.subr.mxu0 0.0
          %681 = vmatpush1.msra.mxu0 %v619
          %682 = vmatprep.subr.mxu0 0.0
          %683 = vmatpush1.msra.mxu0 %v618
          %684 = vmatprep.subr.mxu0 0.0
          %685 = vmatpush1.msra.mxu0 %v617
          %686 = vmatprep.subr.mxu0 0.0
          %687 = vmatpush2.msra.mxu0 0.0
          %688 = vmatprep.subr.mxu0 0.0
          %689 = vmatpush2.msra.mxu0 0.0
          %690 = vmatprep.subr.mxu0 0.0
          %691 = vmatpush2.msra.mxu0 0.0
          %692 = vmatprep.subr.mxu0 0.0
          %693 = vmatpush2.msra.mxu0 0.0
          %694 = vmatprep.subr.mxu0 0.0
          %695 = vmatpush2.msra.mxu0 0.0
          %696 = vmatprep.subr.mxu0 0.0
          %697 = vmatpush2.msra.mxu0 0.0
          %698 = vmatprep.subr.mxu0 0.0
          %699 = vmatpush2.msra.mxu0 0.0
          %700 = vmatprep.subr.mxu0 0.0
          %701 = vmatpush2.msra.mxu0 0.0
          %702 = vmatprep.subr.mxu0 0.0
          %703 = vmatpush2.msra.mxu0 0.0
          %704 = vmatprep.subr.mxu0 0.0
          %705 = vmatpush2.msra.mxu0 0.0
          %706 = vmatprep.subr.mxu0 0.0
          %707 = vmatpush2.msra.mxu0 0.0
          %708 = vmatprep.subr.mxu0 0.0
          %709 = vmatpush2.msra.mxu0 0.0
          %710 = vmatprep.subr.mxu0 0.0
          %711 = vmatpush2.msra.mxu0 0.0
          %712 = vmatprep.subr.mxu0 0.0
          %713 = vmatpush2.msra.mxu0 0.0
          %714 = vmatprep.subr.mxu0 0.0
          %715 = vmatpush2.msra.mxu0 0.0
          %716 = vmatprep.subr.mxu0 0.0
          %717 = vmatpush2.msra.mxu0 0.0
          %718 = vmatprep.mubr.f32.mxu0 0.0
          %719 = vmatmul.mubr.f32.gmra.mxu0 %v643
          %v720 = vpop.f32.mrf.mxu0
          %v721 = vadd.f32 %v624, %v720
          %v722 = vpop.f32.mrf.mxu0
          %723 = vmatprep.mubr.f32.mxu0 0.0
          %724 = vmatmul.mubr.f32.gmra.mxu0 %v646
          %v725 = vpop.f32.mrf.mxu0
          %v726 = vadd.f32 %v629, %v725
          %v727 = vpop.f32.mrf.mxu0
          %728 = vmatprep.mubr.f32.mxu0 0.0
          %729 = vmatmul.mubr.f32.gmra.mxu0 %v649
          %v730 = vpop.f32.mrf.mxu0
          %v731 = vadd.f32 %v634, %v730
          %v732 = vpop.f32.mrf.mxu0
          %733 = vmatprep.mubr.f32.mxu0 0.0
          %734 = vmatmul.mubr.f32.gmra.mxu0 %v652
          %v735 = vpop.f32.mrf.mxu0
          %v736 = vadd.f32 %v639, %v735
          %v737 = vpop.f32.mrf.mxu0
          %738 = vdwg.mxu0
          %v739 = vmax.f32 %v721, 0.0
          %v740 = vmax.f32 %v726, 0.0
          %v741 = vmax.f32 %v731, 0.0
          %v742 = vmax.f32 %v736, 0.0
          %744 = vset.pattern.permute.xlu0 0
          %745 = vperm.xlu0 %744, %v598
          %v746 = vpop.permute.xlu0 %745
          %v749 = vsel %vm641, %v597, 0
          %751 = vmatprep.subr.mxu0 0.0
          %752 = vmatpush1.msra.mxu0 0.0
          %753 = vmatprep.subr.mxu0 0.0
          %754 = vmatpush1.msra.mxu0 0.0
          %755 = vmatprep.subr.mxu0 0.0
          %756 = vmatpush1.msra.mxu0 0.0
          %757 = vmatprep.subr.mxu0 0.0
          %758 = vmatpush1.msra.mxu0 0.0
          %759 = vmatprep.subr.mxu0 0.0
          %760 = vmatpush1.msra.mxu0 0.0
          %761 = vmatprep.subr.mxu0 0.0
          %762 = vmatpush1.msra.mxu0 0.0
          %763 = vmatprep.subr.mxu0 0.0
          %764 = vmatpush1.msra.mxu0 0.0
          %765 = vmatprep.subr.mxu0 0.0
          %766 = vmatpush1.msra.mxu0 0.0
          %767 = vmatprep.subr.mxu0 0.0
          %768 = vmatpush1.msra.mxu0 0.0
          %769 = vmatprep.subr.mxu0 0.0
          %770 = vmatpush1.msra.mxu0 0.0
          %771 = vmatprep.subr.mxu0 0.0
          %772 = vmatpush1.msra.mxu0 0.0
          %773 = vmatprep.subr.mxu0 0.0
          %774 = vmatpush1.msra.mxu0 0.0
          %775 = vmatprep.subr.mxu0 0.0
          %776 = vmatpush1.msra.mxu0 %v742
          %777 = vmatprep.subr.mxu0 0.0
          %778 = vmatpush1.msra.mxu0 %v741
          %779 = vmatprep.subr.mxu0 0.0
          %780 = vmatpush1.msra.mxu0 %v740
          %781 = vmatprep.subr.mxu0 0.0
          %782 = vmatpush1.msra.mxu0 %v739
          %783 = vmatprep.subr.mxu0 0.0
          %784 = vmatpush2.msra.mxu0 0.0
          %785 = vmatprep.subr.mxu0 0.0
          %786 = vmatpush2.msra.mxu0 0.0
          %787 = vmatprep.subr.mxu0 0.0
          %788 = vmatpush2.msra.mxu0 0.0
          %789 = vmatprep.subr.mxu0 0.0
          %790 = vmatpush2.msra.mxu0 0.0
          %791 = vmatprep.subr.mxu0 0.0
          %792 = vmatpush2.msra.mxu0 0.0
          %793 = vmatprep.subr.mxu0 0.0
          %794 = vmatpush2.msra.mxu0 0.0
          %795 = vmatprep.subr.mxu0 0.0
          %796 = vmatpush2.msra.mxu0 0.0
          %797 = vmatprep.subr.mxu0 0.0
          %798 = vmatpush2.msra.mxu0 0.0
          %799 = vmatprep.subr.mxu0 0.0
          %800 = vmatpush2.msra.mxu0 0.0
          %801 = vmatprep.subr.mxu0 0.0
          %802 = vmatpush2.msra.mxu0 0.0
          %803 = vmatprep.subr.mxu0 0.0
          %804 = vmatpush2.msra.mxu0 0.0
          %805 = vmatprep.subr.mxu0 0.0
          %806 = vmatpush2.msra.mxu0 0.0
          %807 = vmatprep.subr.mxu0 0.0
          %808 = vmatpush2.msra.mxu0 0.0
          %809 = vmatprep.subr.mxu0 0.0
          %810 = vmatpush2.msra.mxu0 0.0
          %811 = vmatprep.subr.mxu0 0.0
          %812 = vmatpush2.msra.mxu0 0.0
          %813 = vmatprep.subr.mxu0 0.0
          %814 = vmatpush2.msra.mxu0 0.0
          %815 = vmatprep.mubr.f32.mxu0 0.0
          %816 = vmatmul.mubr.f32.gmra.mxu0 %v749
          %v817 = vpop.f32.mrf.mxu0
          %v818 = vadd.f32 %v746, %v817
          %v819 = vpop.f32.mrf.mxu0
          %820 = vdwg.mxu0
          %vm821 = vcmp.gt.f32.partialorder %v818, 0.0
          %v822 = vadd.f32 %v818, 1.0
          %v823 = vmul.f32 %v818, 1.442695
          %v824 = vpow.pop %v823
          %v825 = vsel %vm821, %v822, %v824
          %v826 = vstv %s607
          %v827 = vmul.f32 %v826, %v825
          %v828 = vadd.f32 %v605, %v827
        $region77: #{tpu_custom_call.1} parent=63 // loop_footer
          %s604 = sadd.s32 1, %s600
        $region78: #{tpu_custom_call.1} parent=63 // loop_footer_branch
          %599 = sbr.rel target = $region74
        $region79: #{tpu_custom_call.1} parent=63 // loop_exit
          _
        %v829 = vmul.f32 %v605, %v583
        %v830 = vadd.f32 %v829, %v424
        %831 = vst [vmem:[%s415] sm:$0xf] %v830
        %s832 = sand.u32 %s276, 1
        %s833 = scalar_lea.sflag [#allocation3], %s832
        %s834 = sand.u32 %s276, 1
        %s835 = smul.addr %s834, 4
        %s836 = scalar_lea.vmem [#allocation7], %s835
        // Predicated region
        $region80: #{tpu_custom_call.1} parent=63 // pred_check
          %p837 = pneg %p286
        $region81: #{tpu_custom_call.1} parent=63 // pred_check_branch
          %839 = sbr.rel (%p837) target = $region83
        $region82: #{tpu_custom_call.1} parent=63 // pred_region
          %s841 = ssub.s32 64, 64
          %842 = vsyncadd %s833, %s841
          %s843 = smul.addr %s27, 64
          %s844 = scalar_lea.hbm %s11, %s843
          %s846 = sshll.u32 %s836, 4
          %s847 = int_to_ptr.vmem [resolvable:$true] %s846
          %849 = dma.vmem_to_hbm [thread:$0]  %s847, 64, %s844, %s833
        $region83: #{tpu_custom_call.1} parent=63 // pred_fallthru
          _
      $region64: #{tpu_custom_call.1} parent=5 // pred_fallthru
        _
      %p850 = scmp.le.s32.totalorder 2, %s22
      // Predicated region
      $region84: #{tpu_custom_call.1} parent=5 // pred_check
        %p851 = pneg %p850
      $region85: #{tpu_custom_call.1} parent=5 // pred_check_branch
        %853 = sbr.rel (%p851) target = $region87
      $region86: #{tpu_custom_call.1} parent=5 // pred_region
        %s854 = ssub.s32 %s22, 2
        // Predicated region
        $region88: #{tpu_custom_call.1} parent=86 // pred_check
          %p855 = pneg %p292
        $region89: #{tpu_custom_call.1} parent=86 // pred_check_branch
          %857 = sbr.rel (%p855) target = $region91
        $region90: #{tpu_custom_call.1} parent=86 // pred_region
          %s858 = sand.u32 %s277, 1
          %s859 = scalar_lea.sflag [#allocation3], %s858
          %s860 = sand.u32 %s277, 1
          %s861 = smul.addr %s860, 4
          %s862 = scalar_lea.vmem [#allocation7], %s861
          %863 = dma.done %s859, 64
        $region91: #{tpu_custom_call.1} parent=86 // pred_fallthru
          _
      $region87: #{tpu_custom_call.1} parent=5 // pred_fallthru
        _
    $region6: #{tpu_custom_call.1} parent=1 // loop_footer
      %s26 = sadd.s32 1, %s22
    $region7: #{tpu_custom_call.1} parent=1 // loop_footer_branch
      %21 = sbr.rel target = $region3
    $region8: #{tpu_custom_call.1} parent=1 // loop_exit
      _
    %864 = vsyncpa [#allocation3], 1
    %s865 = scalar_lea.sflag [#allocation3], 1
    %866 = vsyncpa %s865, 1
    %867 = vsyncpa [#allocation4], 1
    %s868 = scalar_lea.sflag [#allocation4], 1
    %869 = vsyncpa %s868, 1
    %870 = vsyncpa [#allocation6], 1

</llo_original>
